<compile_context>
chip_gen: v5e
topology: v5e:2x2
jax: 0.10.0
libtpu: 0.0.40
codegen_flags: <defaults>
</compile_context>

<pallas_src>
import math
import functools

import jax
import jax.numpy as jnp
from jax.experimental import pallas as pl
from jax.experimental.pallas import tpu as pltpu


def _make_pos_encoding(max_len: int, dim_model: int) -> jnp.ndarray:
    """Deterministic sinusoidal table, identical to the PyTorch __init__."""
    assert dim_model % 2 == 0, "dim_model must be even (same assumption as the PyTorch module)"
    positions = jnp.arange(max_len, dtype=jnp.float32)[:, None]               # (L, 1)
    division = jnp.exp(
        jnp.arange(0, dim_model, 2, dtype=jnp.float32)
        * (-math.log(10000.0) / dim_model)
    )                                                                          # (D//2,)
    pe = jnp.zeros((max_len, dim_model), dtype=jnp.float32)
    pe = pe.at[:, 0::2].set(jnp.sin(positions * division))
    pe = pe.at[:, 1::2].set(jnp.cos(positions * division))
    return pe                                                                  # (L, D)


def _pe_add_kernel(x_ref, pe_ref, o_ref):
    # x_ref: (TB, TS, D), pe_ref: (TS, D) -- broadcast-add over the batch tile.
    o_ref[...] = x_ref[...] + pe_ref[...][None, :, :]


def _pe_add_dropout_kernel(x_ref, pe_ref, bits_ref, o_ref, *, threshold, scale):
    # Inverted dropout: keep with prob (1 - p), scale kept values by 1/(1 - p).
    y = x_ref[...] + pe_ref[...][None, :, :]
    keep = bits_ref[...] >= jnp.uint32(threshold)
    o_ref[...] = jnp.where(keep, y * jnp.asarray(scale, dtype=y.dtype), jnp.zeros_like(y))


def _choose_tiles(B, S, D, itemsize, tile_budget_bytes=4 * 1024 * 1024):
    """Pick (TB, TS) so one x-tile is ~tile_budget_bytes (VMEM-safe on v7x too)."""
    row_bytes = S * D * itemsize
    if row_bytes <= tile_budget_bytes:
        # Small/medium S*D: pack many batch rows per grid step (big slabs,
        # amortize ~0.35us per-step overhead).
        TB = int(max(1, min(B, tile_budget_bytes // row_bytes)))
        TS = S
    else:
        # Large S*D: split the sequence axis; TS a multiple of 8 (sublane rule).
        TB = 1
        TS = int(max(8, (tile_budget_bytes // (D * itemsize)) // 8 * 8))
        TS = min(TS, S)
    return TB, TS


def positional_encoding_forward(
    token_embedding: jnp.ndarray,   # (B, S, D)
    pos_encoding: jnp.ndarray,      # (max_len, D)
    *,
    dropout_p: float,
    train: bool = False,
    rng_key=None,
) -> jnp.ndarray:
    B, S, D = token_embedding.shape
    dtype = token_embedding.dtype
    itemsize = jnp.dtype(dtype).itemsize

    # == pos_encoding.index_select(dim=1, arange(S)); cast to input dtype so the
    # PE DMA/VMEM bytes match the (possibly bf16) activations.
    pe_slice = pos_encoding[:S, :].astype(dtype)

    TB, TS = _choose_tiles(B, S, D, itemsize)
    grid = (pl.cdiv(B, TB), pl.cdiv(S, TS))

    x_spec = pl.BlockSpec((TB, TS, D), lambda bi, si: (bi, si, 0))
    pe_spec = pl.BlockSpec((TS, D), lambda bi, si: (si, 0))
    out_spec = pl.BlockSpec((TB, TS, D), lambda bi, si: (bi, si, 0))

    use_dropout = bool(train) and float(dropout_p) > 0.0
    if use_dropout:
        if rng_key is None:
            rng_key = jax.random.PRNGKey(0)
        # Random bits are generated host/XLA-side and streamed into the kernel
        # (no pltpu.prng_* -> also works under interpret mode).
        bits = jax.random.bits(rng_key, (B, S, D), dtype=jnp.uint32)
        threshold = min(int(float(dropout_p) * 4294967296.0), 4294967295)
        scale = 1.0 / (1.0 - float(dropout_p))
        kernel = functools.partial(_pe_add_dropout_kernel, threshold=threshold, scale=scale)
        in_specs = [x_spec, pe_spec, x_spec]
        args = (token_embedding, pe_slice, bits)
    else:
        kernel = _pe_add_kernel
        in_specs = [x_spec, pe_spec]
        args = (token_embedding, pe_slice)

    grid_spec = pltpu.PrefetchScalarGridSpec(
        num_scalar_prefetch=0,
        grid=grid,
        in_specs=in_specs,
        out_specs=out_spec,
    )

    return pl.pallas_call(
        kernel,
        out_shape=jax.ShapeDtypeStruct((B, S, D), dtype),
        grid_spec=grid_spec,
        compiler_params=pltpu.CompilerParams(
            # No cross-step state left in the kernel -> let v7x shard across TCs.
            dimension_semantics=("parallel", "parallel"),
        ),
    )(*args)


if __name__ == "__main__":
    # Small, module-consistent shapes: (batch=2, seq=8, dim_model=32)
    B, S, D = 2, 8, 32
    max_len = 64
    dropout_p = 0.1

    key = jax.random.PRNGKey(0)
    x_key, drop_key = jax.random.split(key)
    token_embedding = jax.random.normal(x_key, (B, S, D), dtype=jnp.float32)

    pos_encoding = _make_pos_encoding(max_len, D)

    # Eval-mode forward (dropout = identity), matches nn.Dropout in eval.
    out_eval = positional_encoding_forward(
        token_embedding, pos_encoding, dropout_p=dropout_p, train=False
    )
    out_eval = jax.block_until_ready(out_eval)

    # Training-mode forward (dropout mask from jax.random bits, deterministic key).
    out_train = positional_encoding_forward(
        token_embedding, pos_encoding, dropout_p=dropout_p, train=True, rng_key=drop_key
    )
    out_train = jax.block_until_ready(out_train)

    # Sanity checks against plain JAX.
    ref_eval = token_embedding + pos_encoding[None, :S, :]
    assert jnp.allclose(out_eval, ref_eval, atol=1e-5, rtol=1e-5)

    bits = jax.random.bits(drop_key, (B, S, D), dtype=jnp.uint32)
    threshold = min(int(dropout_p * 4294967296.0), 4294967295)
    keep = bits >= jnp.uint32(threshold)
    ref_train = jnp.where(keep, ref_eval / (1.0 - dropout_p), 0.0)
    assert jnp.allclose(out_train, ref_train, atol=1e-5, rtol=1e-5)

    assert out_eval.shape == (B, S, D) and out_train.shape == (B, S, D)
    print("KERNEL_OK")
</pallas_src>

<mosaic_0001>
module attributes {stable_mosaic.version = 11 : i64} {
  func.func @_pe_add_kernel(%arg0: i32, %arg1: i32, %arg2: memref<2x8x32xf32, #tpu.memory_space<vmem>>, %arg3: memref<8x32xf32, #tpu.memory_space<vmem>>, %arg4: memref<2x8x32xf32, #tpu.memory_space<vmem>>) attributes {dimension_semantics = [#tpu.dimension_semantics<parallel>, #tpu.dimension_semantics<parallel>], iteration_bounds = array<i64: 1, 1>, scalar_prefetch = 0 : i64, scratch_operands = 0 : i64, tpu.core_type = #tpu.core_type<tc>, window_params = [{transform_indices = @transform_0, window_bounds = array<i64: 2, 8, 32>}, {transform_indices = @transform_1, window_bounds = array<i64: 8, 32>}, {transform_indices = @transform_2, window_bounds = array<i64: 2, 8, 32>}]} {
    %c0 = arith.constant 0 : index
    %c0_0 = arith.constant 0 : index
    %c0_1 = arith.constant 0 : index
    %0 = vector.load %arg2[%c0, %c0_0, %c0_1] : memref<2x8x32xf32, #tpu.memory_space<vmem>>, vector<2x8x32xf32>
    %c0_2 = arith.constant 0 : index
    %c0_3 = arith.constant 0 : index
    %1 = vector.load %arg3[%c0_2, %c0_3] : memref<8x32xf32, #tpu.memory_space<vmem>>, vector<8x32xf32>
    %2 = vector.shape_cast %1 : vector<8x32xf32> to vector<1x8x32xf32>
    %3 = vector.broadcast %2 : vector<1x8x32xf32> to vector<2x8x32xf32>
    %4 = arith.addf %0, %3 : vector<2x8x32xf32>
    %c0_4 = arith.constant 0 : index
    %c0_5 = arith.constant 0 : index
    %c0_6 = arith.constant 0 : index
    %5 = vector.load %arg4[%c0_4, %c0_5, %c0_6] : memref<2x8x32xf32, #tpu.memory_space<vmem>>, vector<2x8x32xf32>
    tpu.vector_store %arg4[%c0_4, %c0_5, %c0_6], %4 {strides = array<i32>} : memref<2x8x32xf32, #tpu.memory_space<vmem>>, vector<2x8x32xf32>,
    return
  }
  func.func @transform_0(%arg0: i32, %arg1: i32) -> (i32, i32, i32) {
    %c0_i32 = arith.constant 0 : i32
    %c0_i32_0 = arith.constant 0 : i32
    return %arg0, %arg1, %c0_i32 : i32, i32, i32
  }
  func.func @transform_1(%arg0: i32, %arg1: i32) -> (i32, i32) {
    %c0_i32 = arith.constant 0 : i32
    %c0_i32_0 = arith.constant 0 : i32
    return %arg1, %c0_i32 : i32, i32
  }
  func.func @transform_2(%arg0: i32, %arg1: i32) -> (i32, i32, i32) {
    %c0_i32 = arith.constant 0 : i32
    %c0_i32_0 = arith.constant 0 : i32
    return %arg0, %arg1, %c0_i32 : i32, i32, i32
  }
}

</mosaic_0001>

<llo_original>
// kernel: tpu_custom_call.1
$region0: #{tpu_custom_call.1}
  #allocation0 [shape = 'u32[]', space=smem, size = 0x4, offset = 0x4, fixed_abs, tag = 'smem constant byte address 0x4 - core index']
  #allocation1 [shape = 'u32[72,128]{1,0:T(1,128)}', space=vmem, size = 0x9000, scoped, tag = 'internal scratch']
  %s0 = inlined_call_operand.hbm [shape: f32[2,8,32], index: 0, kind: input, shape index: {}]
  %s1 = inlined_call_operand.hbm [shape: f32[8,32], index: 1, kind: input, shape index: {}]
  %s2 = inlined_call_operand.hbm [shape: f32[2,8,32], index: 2, kind: output, shape index: {}]
  %s3 = sld [smem:[#allocation0]]
  $region26: #{tpu_custom_call.1} parent=0
    _
  %s5 = ssub.s32 1, %s3
  %s6 = scalar_select 0, %s5, %s3
  $region1: #{tpu_custom_call.1} parent=0
    #allocation2 [shape = 'u8[8192]{0}', space=vmem, size = 0x2000, scoped, tag = 'input window, operand 0, single buffered']
    #allocation3 [shape = 's32[1]{0}', space=sflag, size = 0x4, scoped, tag = 'scoped memory for tpu_custom_call.1']
    #allocation4 [shape = 's32[1]{0}', space=sflag, size = 0x4, scoped, tag = 'scoped memory for tpu_custom_call.1']
    #allocation5 [shape = 'u8[4096]{0}', space=vmem, size = 0x1000, scoped, tag = 'input window, operand 1, single buffered']
    #allocation6 [shape = 's32[1]{0}', space=sflag, size = 0x4, scoped, tag = 'scoped memory for tpu_custom_call.1']
    #allocation7 [shape = 'u8[8192]{0}', space=vmem, size = 0x2000, scoped, tag = 'output window, operand 0, single buffered']
    %7 = vsyncpa [#allocation3], 0
    %8 = vsyncpa [#allocation6], 0
    %9 = vsyncpa [#allocation4], 0
    // Predicated region
    $region2: #{tpu_custom_call.1} parent=1 // pred_check
      _
    $region3: #{tpu_custom_call.1} parent=1 // pred_check_branch
      %11 = sbr.rel (0) target = $region5
    $region4: #{tpu_custom_call.1} parent=1 // pred_region
      %13 = vsyncadd [#allocation3], 0
      %s14 = sshll.u32 %s0, 4
      %s15 = int_to_ptr.hbm [resolvable:$true] %s14
      %s16 = sshll.u32 [#allocation2], 4
      %s17 = int_to_ptr.vmem [resolvable:$true] %s16
      %22 = dma.hbm_to_vmem [thread:$0]  %s15, 256, %s17, [#allocation3], 128, 128, 8
    $region5: #{tpu_custom_call.1} parent=1 // pred_fallthru
      _
    // Predicated region
    $region6: #{tpu_custom_call.1} parent=1 // pred_check
      _
    $region7: #{tpu_custom_call.1} parent=1 // pred_check_branch
      %24 = sbr.rel (0) target = $region9
    $region8: #{tpu_custom_call.1} parent=1 // pred_region
      %26 = vsyncadd [#allocation6], 0
      %s28 = sshll.u32 %s1, 4
      %s29 = int_to_ptr.hbm [resolvable:$true] %s28
      %s30 = sshll.u32 [#allocation5], 4
      %s31 = int_to_ptr.vmem [resolvable:$true] %s30
      %33 = dma.hbm_to_vmem [thread:$0]  %s29, 128, %s31, [#allocation6]
    $region9: #{tpu_custom_call.1} parent=1 // pred_fallthru
      _
    // Predicated region
    $region10: #{tpu_custom_call.1} parent=1 // pred_check
      _
    $region11: #{tpu_custom_call.1} parent=1 // pred_check_branch
      %35 = sbr.rel (0) target = $region13
    $region12: #{tpu_custom_call.1} parent=1 // pred_region
      %37 = dma.done [#allocation3], 256
    $region13: #{tpu_custom_call.1} parent=1 // pred_fallthru
      _
    // Predicated region
    $region14: #{tpu_custom_call.1} parent=1 // pred_check
      _
    $region15: #{tpu_custom_call.1} parent=1 // pred_check_branch
      %39 = sbr.rel (0) target = $region17
    $region16: #{tpu_custom_call.1} parent=1 // pred_region
      %41 = dma.done [#allocation6], 128
    $region17: #{tpu_custom_call.1} parent=1 // pred_fallthru
      _
    %v42 = vld [vmem:[#allocation2] sm:$0xff]
    %v43 = vld [vmem:[#allocation2 + $0x8] sm:$0xff]
    %v44 = vld [vmem:[#allocation5] sm:$0xff]
    %v45 = vadd.f32 %v42, %v44
    %v46 = vadd.f32 %v43, %v44
    %vm47 = vcmask 261120
    %48 = vst.msk [vmem:[#allocation7] sm:$0xff] %vm47, %v45
    %49 = vst.msk [vmem:[#allocation7 + $0x8] sm:$0xff] %vm47, %v46
    // Predicated region
    $region18: #{tpu_custom_call.1} parent=1 // pred_check
      _
    $region19: #{tpu_custom_call.1} parent=1 // pred_check_branch
      %51 = sbr.rel (0) target = $region21
    $region20: #{tpu_custom_call.1} parent=1 // pred_region
      %53 = vsyncadd [#allocation4], 0
      %s54 = sshll.u32 [#allocation7], 4
      %s55 = int_to_ptr.vmem [resolvable:$true] %s54
      %s56 = sshll.u32 %s2, 4
      %s57 = int_to_ptr.hbm [resolvable:$true] %s56
      %62 = dma.vmem_to_hbm [thread:$0]  %s55, 256, %s57, [#allocation4], 128, 128, 8
    $region21: #{tpu_custom_call.1} parent=1 // pred_fallthru
      _
    // Predicated region
    $region22: #{tpu_custom_call.1} parent=1 // pred_check
      _
    $region23: #{tpu_custom_call.1} parent=1 // pred_check_branch
      %64 = sbr.rel (0) target = $region25
    $region24: #{tpu_custom_call.1} parent=1 // pred_region
      %66 = dma.done [#allocation4], 256
    $region25: #{tpu_custom_call.1} parent=1 // pred_fallthru
      _
    %67 = vsyncpa [#allocation3], 1
    %68 = vsyncpa [#allocation6], 1
    %69 = vsyncpa [#allocation4], 1

</llo_original>
